<compile_context>
chip_gen: v7x
topology: tpu7x:2x2x1
jax: 0.10.0
libtpu: 0.0.40
codegen_flags: <defaults>
</compile_context>

<pallas_src>
import functools
import math

import jax
import jax.numpy as jnp
from jax import lax
from jax.experimental import pallas as pl
from jax.experimental.pallas import tpu as pltpu


# ----------------------------- Pallas kernels ------------------------------

def _conv_mm_kernel(x_ref, w_ref, b_ref, o_ref, *, relu_out):
    acc = jnp.dot(x_ref[...], w_ref[...], preferred_element_type=jnp.float32)
    acc = acc + b_ref[...]
    if relu_out:
        acc = jnp.maximum(acc, 0.0)
    o_ref[...] = acc.astype(o_ref.dtype)


def _conv_mm_res_kernel(x_ref, w_ref, b_ref, res_ref, o_ref, *, relu_out):
    acc = jnp.dot(x_ref[...], w_ref[...], preferred_element_type=jnp.float32)
    acc = acc + b_ref[...] + res_ref[...]
    if relu_out:
        acc = jnp.maximum(acc, 0.0)
    o_ref[...] = acc.astype(o_ref.dtype)


# ----------------------------- helpers --------------------------------------

def _round_up(x, m):
    return ((x + m - 1) // m) * m


def _choose_tm(M, Kp, Cp, has_res, budget_bytes=32 * 1024 * 1024):
    """Pick an M tile (multiple of 8) so the pipeline fits a conservative VMEM budget."""
    def vmem_bytes(tm):
        stream = Kp + Cp + (Cp if has_res else 0)            # streamed f32 words per row
        return 4 * (2 * tm * stream + 2 * (Kp * Cp + Cp))    # 2x buffers + resident w/b
    tm = 1024
    while tm > 8 and vmem_bytes(tm) > budget_bytes:
        tm //= 2
    return min(tm, _round_up(max(M, 8), 8))


# ----------------------------- conv wrapper --------------------------------

def conv2d_pallas(x, w, b, *, stride, pad, pre_relu=False, relu_out=False, residual=None):
    """x: (N, H, W, Cin) NHWC; w: (Cout, Cin, kh, kw) (PyTorch OIHW); b: (Cout,)."""
    N, H, W, Cin = x.shape
    Cout, Cin_w, kh, kw = w.shape
    assert Cin == Cin_w

    if pre_relu:
        # Applied once per input element (fused by XLA into the im2col below),
        # instead of kh*kw times on the duplicated patch matrix inside the kernel.
        x = jnp.maximum(x, 0.0)

    xp = jnp.pad(x, ((0, 0), (pad, pad), (pad, pad), (0, 0)))
    Ho = (H + 2 * pad - kh) // stride + 1
    Wo = (W + 2 * pad - kw) // stride + 1
    M = N * Ho * Wo
    K = kh * kw * Cin

    # TODO(synk): replace the plain-JAX im2col with a halo-tile direct conv
    # (memory_space=pl.ANY + manual make_async_copy per tap) to avoid the
    # kh*kw duplication of HBM traffic for the 3x3 / 4x4 kernels.
    cols = []
    for i in range(kh):
        for j in range(kw):
            cols.append(xp[:, i:i + Ho * stride:stride, j:j + Wo * stride:stride, :])
    patches = jnp.stack(cols, axis=3).reshape(M, K)

    # Lane-dense padding of the contraction and output channel dims.
    Kp = _round_up(K, 128)
    Cp = _round_up(Cout, 128)

    w_mat = jnp.transpose(w, (2, 3, 1, 0)).reshape(K, Cout)
    w_mat = jnp.pad(w_mat, ((0, Kp - K), (0, Cp - Cout)))
    b_mat = jnp.pad(b.reshape(1, Cout), ((0, 0), (0, Cp - Cout)))

    has_res = residual is not None
    TM = _choose_tm(M, Kp, Cp, has_res)
    Mp = _round_up(M, TM)
    grid = (Mp // TM,)

    patches = jnp.pad(patches, ((0, Mp - M), (0, Kp - K)))

    in_specs = [
        pl.BlockSpec((TM, Kp), lambda i: (i, 0)),   # streamed patches tile
        pl.BlockSpec((Kp, Cp), lambda i: (0, 0)),   # weight: resident across grid
        pl.BlockSpec((1, Cp), lambda i: (0, 0)),    # bias:   resident across grid
    ]
    args = [patches, w_mat, b_mat]

    if has_res:
        res_mat = jnp.pad(residual.reshape(M, Cout), ((0, Mp - M), (0, Cp - Cout)))
        in_specs.append(pl.BlockSpec((TM, Cp), lambda i: (i, 0)))
        args.append(res_mat)
        kern = functools.partial(_conv_mm_res_kernel, relu_out=relu_out)
    else:
        kern = functools.partial(_conv_mm_kernel, relu_out=relu_out)

    out = pl.pallas_call(
        kern,
        out_shape=jax.ShapeDtypeStruct((Mp, Cp), x.dtype),
        grid=grid,
        in_specs=in_specs,
        out_specs=pl.BlockSpec((TM, Cp), lambda i: (i, 0)),
        compiler_params=pltpu.CompilerParams(
            dimension_semantics=("parallel",),
            vmem_limit_bytes=64 * 1024 * 1024,
        ),
    )(*args)

    return out[:M, :Cout].reshape(N, Ho, Wo, Cout)


# --------------------------- parameter init --------------------------------

def _conv_init(key, cout, cin, k):
    """PyTorch default Conv2d init: U(-1/sqrt(fan_in), 1/sqrt(fan_in))."""
    k1, k2 = jax.random.split(key)
    fan_in = cin * k * k
    bound = 1.0 / math.sqrt(fan_in)
    w = jax.random.uniform(k1, (cout, cin, k, k), jnp.float32, -bound, bound)
    b = jax.random.uniform(k2, (cout,), jnp.float32, -bound, bound)
    return w, b


def init_encoder_params(key, in_channel, channel, downsample, n_res_blocks=1):
    assert downsample in (2, 4)
    keys = jax.random.split(key, 2 + 2 * max(n_res_blocks, 1))
    params = {}
    if downsample == 4:
        params["conv0_w"], params["conv0_b"] = _conv_init(keys[0], channel, in_channel, 4)
        params["conv1_w"], params["conv1_b"] = _conv_init(keys[1], channel, channel, 4)
    else:  # downsample == 2
        params["conv0_w"], params["conv0_b"] = _conv_init(keys[0], channel // 2, in_channel, 4)
        params["conv1_w"], params["conv1_b"] = _conv_init(keys[1], channel, channel // 2, 3)
    for r in range(n_res_blocks):
        # ResBlock: ReLU -> Conv3x3(channel->channel) -> ReLU -> Conv1x1(channel->channel)
        params[f"res{r}_w1"], params[f"res{r}_b1"] = _conv_init(keys[2 + 2 * r], channel, channel, 3)
        params[f"res{r}_w2"], params[f"res{r}_b2"] = _conv_init(keys[3 + 2 * r], channel, channel, 1)
    return params


# ----------------------------- Encoder forward ------------------------------

def encoder_forward(params, x_nchw, *, downsample, n_res_blocks=1):
    x = jnp.transpose(x_nchw, (0, 2, 3, 1))  # NCHW -> NHWC
    trailing_relu_on_conv1 = (n_res_blocks == 0)
    if downsample == 4:
        x = conv2d_pallas(x, params["conv0_w"], params["conv0_b"], stride=2, pad=1, relu_out=True)
        x = conv2d_pallas(x, params["conv1_w"], params["conv1_b"], stride=2, pad=1,
                          relu_out=trailing_relu_on_conv1)
    else:  # downsample == 2
        x = conv2d_pallas(x, params["conv0_w"], params["conv0_b"], stride=2, pad=1, relu_out=True)
        x = conv2d_pallas(x, params["conv1_w"], params["conv1_b"], stride=1, pad=1,
                          relu_out=trailing_relu_on_conv1)
    for r in range(n_res_blocks):
        is_last = (r == n_res_blocks - 1)
        h = conv2d_pallas(x, params[f"res{r}_w1"], params[f"res{r}_b1"],
                          stride=1, pad=1, pre_relu=True, relu_out=True)
        # Fuse the residual add; the trailing nn.ReLU of the encoder is fused
        # into the epilogue of the last residual conv (saves one HBM pass).
        x = conv2d_pallas(h, params[f"res{r}_w2"], params[f"res{r}_b2"],
                          stride=1, pad=0, residual=x, relu_out=is_last)
    return jnp.transpose(x, (0, 3, 1, 2))  # NHWC -> NCHW


# ---------------------------- pure-JAX reference -----------------------------

def _conv_ref(x, w, b, stride, pad):
    out = lax.conv_general_dilated(
        x, w, (stride, stride), [(pad, pad), (pad, pad)],
        dimension_numbers=("NCHW", "OIHW", "NCHW"))
    return out + b[None, :, None, None]


def encoder_ref(params, x, *, downsample, n_res_blocks=1):
    if downsample == 4:
        x = jax.nn.relu(_conv_ref(x, params["conv0_w"], params["conv0_b"], 2, 1))
        x = _conv_ref(x, params["conv1_w"], params["conv1_b"], 2, 1)
    else:
        x = jax.nn.relu(_conv_ref(x, params["conv0_w"], params["conv0_b"], 2, 1))
        x = _conv_ref(x, params["conv1_w"], params["conv1_b"], 1, 1)
    for r in range(n_res_blocks):
        h = _conv_ref(jax.nn.relu(x), params[f"res{r}_w1"], params[f"res{r}_b1"], 1, 1)
        h = _conv_ref(jax.nn.relu(h), params[f"res{r}_w2"], params[f"res{r}_b2"], 1, 0)
        x = x + h
    return jax.nn.relu(x)


# ---------------------------------- main ------------------------------------

if __name__ == "__main__":
    batch, in_channel, channel, spatial = 2, 4, 8, 16
    n_res_blocks = 1

    key = jax.random.PRNGKey(0)
    kx, kp2, kp4 = jax.random.split(key, 3)
    x = jax.random.normal(kx, (batch, in_channel, spatial, spatial), jnp.float32)

    for downsample, kp in ((4, kp4), (2, kp2)):
        params = init_encoder_params(kp, in_channel, channel, downsample, n_res_blocks)

        out = encoder_forward(params, x, downsample=downsample, n_res_blocks=n_res_blocks)
        out = jax.block_until_ready(out)

        ref = encoder_ref(params, x, downsample=downsample, n_res_blocks=n_res_blocks)
        ref = jax.block_until_ready(ref)

        expected = (batch, channel, spatial // downsample, spatial // downsample)
        assert out.shape == expected, (out.shape, expected)
        assert jnp.allclose(out, ref, atol=1e-4, rtol=1e-4), float(jnp.max(jnp.abs(out - ref)))

    print("KERNEL_OK")
</pallas_src>

<mosaic_0001>
module attributes {stable_mosaic.version = 11 : i64} {
  func.func @_conv_mm_kernel(%arg0: i32, %arg1: memref<128x128xf32, #tpu.memory_space<vmem>>, %arg2: memref<128x128xf32, #tpu.memory_space<vmem>>, %arg3: memref<1x128xf32, #tpu.memory_space<vmem>>, %arg4: memref<128x128xf32, #tpu.memory_space<vmem>>) attributes {dimension_semantics = [#tpu.dimension_semantics<parallel>], iteration_bounds = array<i64: 1>, scalar_prefetch = 0 : i64, scratch_operands = 0 : i64, tpu.core_type = #tpu.core_type<tc>, window_params = [{transform_indices = @transform_0, window_bounds = array<i64: 128, 128>}, {pipeline_mode = #tpu.pipeline_mode<synchronous>, transform_indices = @transform_1, window_bounds = array<i64: 128, 128>}, {pipeline_mode = #tpu.pipeline_mode<synchronous>, transform_indices = @transform_2, window_bounds = array<i64: 1, 128>}, {transform_indices = @transform_3, window_bounds = array<i64: 128, 128>}]} {
    %c0 = arith.constant 0 : index
    %c0_0 = arith.constant 0 : index
    %0 = vector.load %arg1[%c0, %c0_0] : memref<128x128xf32, #tpu.memory_space<vmem>>, vector<128x128xf32>
    %c0_1 = arith.constant 0 : index
    %c0_2 = arith.constant 0 : index
    %1 = vector.load %arg2[%c0_1, %c0_2] : memref<128x128xf32, #tpu.memory_space<vmem>>, vector<128x128xf32>
    %cst = arith.constant dense<0.000000e+00> : vector<128x128xf32>
    %2 = tpu.matmul %0, %1, %cst {dimension_numbers = #tpu.dot_dimension_numbers<[1], [0], [0], [1], [0, 0, 1, 1], [], []>} : vector<128x128xf32>, vector<128x128xf32>, vector<128x128xf32> -> vector<128x128xf32>
    %c0_3 = arith.constant 0 : index
    %c0_4 = arith.constant 0 : index
    %3 = vector.load %arg3[%c0_3, %c0_4] : memref<1x128xf32, #tpu.memory_space<vmem>>, vector<1x128xf32>
    %4 = vector.broadcast %3 : vector<1x128xf32> to vector<128x128xf32>
    %5 = arith.addf %2, %4 : vector<128x128xf32>
    %cst_5 = arith.constant 0.000000e+00 : f32
    %6 = vector.broadcast %cst_5 : f32 to vector<128x128xf32>
    %7 = arith.maximumf %5, %6 : vector<128x128xf32>
    %c0_6 = arith.constant 0 : index
    %c0_7 = arith.constant 0 : index
    %8 = vector.load %arg4[%c0_6, %c0_7] : memref<128x128xf32, #tpu.memory_space<vmem>>, vector<128x128xf32>
    tpu.vector_store %arg4[%c0_6, %c0_7], %7 {strides = array<i32>} : memref<128x128xf32, #tpu.memory_space<vmem>>, vector<128x128xf32>,
    return
  }
  func.func @transform_0(%arg0: i32) -> (i32, i32) {
    %c0_i32 = arith.constant 0 : i32
    %c0_i32_0 = arith.constant 0 : i32
    return %arg0, %c0_i32 : i32, i32
  }
  func.func @transform_1(%arg0: i32) -> (i32, i32) {
    %c0_i32 = arith.constant 0 : i32
    %c0_i32_0 = arith.constant 0 : i32
    %c0_i32_1 = arith.constant 0 : i32
    return %c0_i32, %c0_i32_0 : i32, i32
  }
  func.func @transform_2(%arg0: i32) -> (i32, i32) {
    %c0_i32 = arith.constant 0 : i32
    %c0_i32_0 = arith.constant 0 : i32
    %c0_i32_1 = arith.constant 0 : i32
    return %c0_i32, %c0_i32_0 : i32, i32
  }
  func.func @transform_3(%arg0: i32) -> (i32, i32) {
    %c0_i32 = arith.constant 0 : i32
    %c0_i32_0 = arith.constant 0 : i32
    return %arg0, %c0_i32 : i32, i32
  }
}

</mosaic_0001>

<llo_original>
// kernel: tpu_custom_call.1
$region0: #{tpu_custom_call.1}
  #allocation0 [shape = 'u32[]', space=smem, size = 0x4, offset = 0x4, fixed_abs, tag = 'smem constant byte address 0x4 - core index']
  #allocation1 [shape = 'u32[144,128]{1,0:T(1,128)}', space=vmem, size = 0x12000, scoped, tag = 'internal scratch']
  %s0 = inlined_call_operand.hbm [shape: f32[128,128], index: 0, kind: input, shape index: {}]
  %s1 = inlined_call_operand.hbm [shape: f32[128,128], index: 1, kind: input, shape index: {}]
  %s2 = inlined_call_operand.hbm [shape: f32[1,128], index: 2, kind: input, shape index: {}]
  %s3 = inlined_call_operand.hbm [shape: f32[128,128], index: 3, kind: output, shape index: {}]
  %s4 = sld [smem:[#allocation0]]
  $region34: #{tpu_custom_call.1} parent=0
    _
  %s6 = ssub.s32 1, %s4
  %s7 = scalar_select 0, %s6, %s4
  $region1: #{tpu_custom_call.1} parent=0
    #allocation2 [shape = 'u8[65536]{0}', space=vmem, size = 0x10000, scoped, tag = 'input window, operand 0, single buffered']
    #allocation3 [shape = 's32[1]{0}', space=sflag, size = 0x4, scoped, tag = 'scoped memory for tpu_custom_call.1']
    #allocation4 [shape = 's32[1]{0}', space=sflag, size = 0x4, scoped, tag = 'scoped memory for tpu_custom_call.1']
    #allocation5 [shape = 'u8[65536]{0}', space=vmem, size = 0x10000, scoped, tag = 'input window, operand 1, single buffered']
    #allocation6 [shape = 's32[1]{0}', space=sflag, size = 0x4, scoped, tag = 'scoped memory for tpu_custom_call.1']
    #allocation7 [shape = 'u8[512]{0}', space=vmem, size = 0x400, scoped, tag = 'input window, operand 2, single buffered']
    #allocation8 [shape = 'u8[65536]{0}', space=vmem, size = 0x10000, scoped, tag = 'output window, operand 0, single buffered']
    %8 = vsyncpa [#allocation3], 0
    %9 = vsyncpa [#allocation6], 0
    %10 = vsyncpa [#allocation4], 0
    // Predicated region
    $region2: #{tpu_custom_call.1} parent=1 // pred_check
      _
    $region3: #{tpu_custom_call.1} parent=1 // pred_check_branch
      %12 = sbr.rel (0) target = $region5
    $region4: #{tpu_custom_call.1} parent=1 // pred_region
      %s14 = ssub.s32 2048, 2048
      %15 = vsyncadd [#allocation3], %s14
      %s16 = sshll.u32 [#allocation2], 4
      %s17 = int_to_ptr.vmem [resolvable:$true] %s16
      %22 = dma.hbm_to_vmem [thread:$0]  %s0, 2048, %s17, [#allocation3], 128, 128, 8
    $region5: #{tpu_custom_call.1} parent=1 // pred_fallthru
      _
    // Predicated region
    $region6: #{tpu_custom_call.1} parent=1 // pred_check
      _
    $region7: #{tpu_custom_call.1} parent=1 // pred_check_branch
      %24 = sbr.rel (0) target = $region9
    $region8: #{tpu_custom_call.1} parent=1 // pred_region
      %s26 = ssub.s32 2048, 2048
      %27 = vsyncadd [#allocation6], %s26
      %s28 = sshll.u32 [#allocation5], 4
      %s29 = int_to_ptr.vmem [resolvable:$true] %s28
      %34 = dma.hbm_to_vmem [thread:$0]  %s1, 2048, %s29, [#allocation6], 128, 128, 8
    $region9: #{tpu_custom_call.1} parent=1 // pred_fallthru
      _
    // Predicated region
    $region10: #{tpu_custom_call.1} parent=1 // pred_check
      _
    $region11: #{tpu_custom_call.1} parent=1 // pred_check_branch
      %36 = sbr.rel (0) target = $region13
    $region12: #{tpu_custom_call.1} parent=1 // pred_region
      %s38 = ssub.s32 16, 16
      %39 = vsyncadd [#allocation6], %s38
      %s41 = sshll.u32 [#allocation7], 4
      %s42 = int_to_ptr.vmem [resolvable:$true] %s41
      %44 = dma.hbm_to_vmem [thread:$0]  %s2, 16, %s42, [#allocation6]
    $region13: #{tpu_custom_call.1} parent=1 // pred_fallthru
      _
    // Predicated region
    $region14: #{tpu_custom_call.1} parent=1 // pred_check
      _
    $region15: #{tpu_custom_call.1} parent=1 // pred_check_branch
      %46 = sbr.rel (0) target = $region17
    $region16: #{tpu_custom_call.1} parent=1 // pred_region
      %47 = dma.done [#allocation3], 2048
    $region17: #{tpu_custom_call.1} parent=1 // pred_fallthru
      _
    // Predicated region
    $region18: #{tpu_custom_call.1} parent=1 // pred_check
      _
    $region19: #{tpu_custom_call.1} parent=1 // pred_check_branch
      %49 = sbr.rel (0) target = $region21
    $region20: #{tpu_custom_call.1} parent=1 // pred_region
      %50 = dma.done [#allocation6], 2048
    $region21: #{tpu_custom_call.1} parent=1 // pred_fallthru
      _
    // Predicated region
    $region22: #{tpu_custom_call.1} parent=1 // pred_check
      _
    $region23: #{tpu_custom_call.1} parent=1 // pred_check_branch
      %52 = sbr.rel (0) target = $region25
    $region24: #{tpu_custom_call.1} parent=1 // pred_region
      %53 = dma.done [#allocation6], 16
    $region25: #{tpu_custom_call.1} parent=1 // pred_fallthru
      _
    %v54 = vld [vmem:[#allocation2] sm:$0xff]
    %v55 = vld [vmem:[#allocation2 + $0x8] sm:$0xff]
    %v56 = vld [vmem:[#allocation2 + $0x10] sm:$0xff]
    %v57 = vld [vmem:[#allocation2 + $0x18] sm:$0xff]
    %v58 = vld [vmem:[#allocation2 + $0x20] sm:$0xff]
    %v59 = vld [vmem:[#allocation2 + $0x28] sm:$0xff]
    %v60 = vld [vmem:[#allocation2 + $0x30] sm:$0xff]
    %v61 = vld [vmem:[#allocation2 + $0x38] sm:$0xff]
    %v62 = vld [vmem:[#allocation2 + $0x40] sm:$0xff]
    %v63 = vld [vmem:[#allocation2 + $0x48] sm:$0xff]
    %v64 = vld [vmem:[#allocation2 + $0x50] sm:$0xff]
    %v65 = vld [vmem:[#allocation2 + $0x58] sm:$0xff]
    %v66 = vld [vmem:[#allocation2 + $0x60] sm:$0xff]
    %v67 = vld [vmem:[#allocation2 + $0x68] sm:$0xff]
    %v68 = vld [vmem:[#allocation2 + $0x70] sm:$0xff]
    %v69 = vld [vmem:[#allocation2 + $0x78] sm:$0xff]
    %v70 = vld [vmem:[#allocation5] sm:$0xff]
    %v71 = vld [vmem:[#allocation5 + $0x8] sm:$0xff]
    %v72 = vld [vmem:[#allocation5 + $0x10] sm:$0xff]
    %v73 = vld [vmem:[#allocation5 + $0x18] sm:$0xff]
    %v74 = vld [vmem:[#allocation5 + $0x20] sm:$0xff]
    %v75 = vld [vmem:[#allocation5 + $0x28] sm:$0xff]
    %v76 = vld [vmem:[#allocation5 + $0x30] sm:$0xff]
    %v77 = vld [vmem:[#allocation5 + $0x38] sm:$0xff]
    %v78 = vld [vmem:[#allocation5 + $0x40] sm:$0xff]
    %v79 = vld [vmem:[#allocation5 + $0x48] sm:$0xff]
    %v80 = vld [vmem:[#allocation5 + $0x50] sm:$0xff]
    %v81 = vld [vmem:[#allocation5 + $0x58] sm:$0xff]
    %v82 = vld [vmem:[#allocation5 + $0x60] sm:$0xff]
    %v83 = vld [vmem:[#allocation5 + $0x68] sm:$0xff]
    %v84 = vld [vmem:[#allocation5 + $0x70] sm:$0xff]
    %v85 = vld [vmem:[#allocation5 + $0x78] sm:$0xff]
    %v86 = vld [vmem:[#allocation7] sm:$0x1]
    %v88 = vlaneseq
    %v89 = vshrl.u32 %v88, 7
    %v90 = vsub.s32 0, %v89
    %v91 = vrot.slane %v86, %v90
    %93 = vmatprep.subr.mxu0 0.0
    %94 = vmatpush1.msra.mxu0 %v70
    %95 = vmatprep.subr.mxu0 0.0
    %96 = vmatpush1.msra.mxu0 %v71
    %97 = vmatprep.subr.mxu0 0.0
    %98 = vmatpush1.msra.mxu0 %v72
    %99 = vmatprep.subr.mxu0 0.0
    %100 = vmatpush1.msra.mxu0 %v73
    %101 = vmatprep.subr.mxu0 0.0
    %102 = vmatpush1.msra.mxu0 %v74
    %103 = vmatprep.subr.mxu0 0.0
    %104 = vmatpush1.msra.mxu0 %v75
    %105 = vmatprep.subr.mxu0 0.0
    %106 = vmatpush1.msra.mxu0 %v76
    %107 = vmatprep.subr.mxu0 0.0
    %108 = vmatpush1.msra.mxu0 %v77
    %109 = vmatprep.subr.mxu0 0.0
    %110 = vmatpush1.msra.mxu0 %v78
    %111 = vmatprep.subr.mxu0 0.0
    %112 = vmatpush1.msra.mxu0 %v79
    %113 = vmatprep.subr.mxu0 0.0
    %114 = vmatpush1.msra.mxu0 %v80
    %115 = vmatprep.subr.mxu0 0.0
    %116 = vmatpush1.msra.mxu0 %v81
    %117 = vmatprep.subr.mxu0 0.0
    %118 = vmatpush1.msra.mxu0 %v82
    %119 = vmatprep.subr.mxu0 0.0
    %120 = vmatpush1.msra.mxu0 %v83
    %121 = vmatprep.subr.mxu0 0.0
    %122 = vmatpush1.msra.mxu0 %v84
    %123 = vmatprep.subr.mxu0 0.0
    %124 = vmatpush1.msra.mxu0 %v85
    %125 = vmatprep.subr.mxu0 0.0
    %126 = vmatpush1.msra.mxu0 0.0
    %127 = vmatprep.subr.mxu0 0.0
    %128 = vmatpush1.msra.mxu0 0.0
    %129 = vmatprep.subr.mxu0 0.0
    %130 = vmatpush1.msra.mxu0 0.0
    %131 = vmatprep.subr.mxu0 0.0
    %132 = vmatpush1.msra.mxu0 0.0
    %133 = vmatprep.subr.mxu0 0.0
    %134 = vmatpush1.msra.mxu0 0.0
    %135 = vmatprep.subr.mxu0 0.0
    %136 = vmatpush1.msra.mxu0 0.0
    %137 = vmatprep.subr.mxu0 0.0
    %138 = vmatpush1.msra.mxu0 0.0
    %139 = vmatprep.subr.mxu0 0.0
    %140 = vmatpush1.msra.mxu0 0.0
    %141 = vmatprep.subr.mxu0 0.0
    %142 = vmatpush1.msra.mxu0 0.0
    %143 = vmatprep.subr.mxu0 0.0
    %144 = vmatpush1.msra.mxu0 0.0
    %145 = vmatprep.subr.mxu0 0.0
    %146 = vmatpush1.msra.mxu0 0.0
    %147 = vmatprep.subr.mxu0 0.0
    %148 = vmatpush1.msra.mxu0 0.0
    %149 = vmatprep.subr.mxu0 0.0
    %150 = vmatpush1.msra.mxu0 0.0
    %151 = vmatprep.subr.mxu0 0.0
    %152 = vmatpush1.msra.mxu0 0.0
    %153 = vmatprep.subr.mxu0 0.0
    %154 = vmatpush1.msra.mxu0 0.0
    %155 = vmatprep.subr.mxu0 0.0
    %156 = vmatpush1.msra.mxu0 0.0
    %157 = vmatprep.mubr.f32.mxu0 0.0
    %158 = vmatmul.mubr.f32.gmra.mrb[0].mxu0 %v54
    %v159 = vpop.f32.mrb[0].mxu0
    %v160 = vadd.f32 %v91, %v159
    %v161 = vpop.f32.mrb[0].mxu0
    %162 = vmatprep.mubr.f32.mxu0 0.0
    %163 = vmatmul.mubr.f32.gmra.mrb[0].mxu0 %v55
    %v164 = vpop.f32.mrb[0].mxu0
    %v165 = vadd.f32 %v91, %v164
    %v166 = vpop.f32.mrb[0].mxu0
    %167 = vmatprep.mubr.f32.mxu0 0.0
    %168 = vmatmul.mubr.f32.gmra.mrb[0].mxu0 %v56
    %v169 = vpop.f32.mrb[0].mxu0
    %v170 = vadd.f32 %v91, %v169
    %v171 = vpop.f32.mrb[0].mxu0
    %172 = vmatprep.mubr.f32.mxu0 0.0
    %173 = vmatmul.mubr.f32.gmra.mrb[0].mxu0 %v57
    %v174 = vpop.f32.mrb[0].mxu0
    %v175 = vadd.f32 %v91, %v174
    %v176 = vpop.f32.mrb[0].mxu0
    %177 = vmatprep.mubr.f32.mxu0 0.0
    %178 = vmatmul.mubr.f32.gmra.mrb[0].mxu0 %v58
    %v179 = vpop.f32.mrb[0].mxu0
    %v180 = vadd.f32 %v91, %v179
    %v181 = vpop.f32.mrb[0].mxu0
    %182 = vmatprep.mubr.f32.mxu0 0.0
    %183 = vmatmul.mubr.f32.gmra.mrb[0].mxu0 %v59
    %v184 = vpop.f32.mrb[0].mxu0
    %v185 = vadd.f32 %v91, %v184
    %v186 = vpop.f32.mrb[0].mxu0
    %187 = vmatprep.mubr.f32.mxu0 0.0
    %188 = vmatmul.mubr.f32.gmra.mrb[0].mxu0 %v60
    %v189 = vpop.f32.mrb[0].mxu0
    %v190 = vadd.f32 %v91, %v189
    %v191 = vpop.f32.mrb[0].mxu0
    %192 = vmatprep.mubr.f32.mxu0 0.0
    %193 = vmatmul.mubr.f32.gmra.mrb[0].mxu0 %v61
    %v194 = vpop.f32.mrb[0].mxu0
    %v195 = vadd.f32 %v91, %v194
    %v196 = vpop.f32.mrb[0].mxu0
    %197 = vmatprep.mubr.f32.mxu0 0.0
    %198 = vmatmul.mubr.f32.gmra.mrb[0].mxu0 %v62
    %v199 = vpop.f32.mrb[0].mxu0
    %v200 = vadd.f32 %v91, %v199
    %v201 = vpop.f32.mrb[0].mxu0
    %202 = vmatprep.mubr.f32.mxu0 0.0
    %203 = vmatmul.mubr.f32.gmra.mrb[0].mxu0 %v63
    %v204 = vpop.f32.mrb[0].mxu0
    %v205 = vadd.f32 %v91, %v204
    %v206 = vpop.f32.mrb[0].mxu0
    %207 = vmatprep.mubr.f32.mxu0 0.0
    %208 = vmatmul.mubr.f32.gmra.mrb[0].mxu0 %v64
    %v209 = vpop.f32.mrb[0].mxu0
    %v210 = vadd.f32 %v91, %v209
    %v211 = vpop.f32.mrb[0].mxu0
    %212 = vmatprep.mubr.f32.mxu0 0.0
    %213 = vmatmul.mubr.f32.gmra.mrb[0].mxu0 %v65
    %v214 = vpop.f32.mrb[0].mxu0
    %v215 = vadd.f32 %v91, %v214
    %v216 = vpop.f32.mrb[0].mxu0
    %217 = vmatprep.mubr.f32.mxu0 0.0
    %218 = vmatmul.mubr.f32.gmra.mrb[0].mxu0 %v66
    %v219 = vpop.f32.mrb[0].mxu0
    %v220 = vadd.f32 %v91, %v219
    %v221 = vpop.f32.mrb[0].mxu0
    %222 = vmatprep.mubr.f32.mxu0 0.0
    %223 = vmatmul.mubr.f32.gmra.mrb[0].mxu0 %v67
    %v224 = vpop.f32.mrb[0].mxu0
    %v225 = vadd.f32 %v91, %v224
    %v226 = vpop.f32.mrb[0].mxu0
    %227 = vmatprep.mubr.f32.mxu0 0.0
    %228 = vmatmul.mubr.f32.gmra.mrb[0].mxu0 %v68
    %v229 = vpop.f32.mrb[0].mxu0
    %v230 = vadd.f32 %v91, %v229
    %v231 = vpop.f32.mrb[0].mxu0
    %232 = vmatprep.mubr.f32.mxu0 0.0
    %233 = vmatmul.mubr.f32.gmra.mrb[0].mxu0 %v69
    %v234 = vpop.f32.mrb[0].mxu0
    %v235 = vadd.f32 %v91, %v234
    %v236 = vpop.f32.mrb[0].mxu0
    %237 = vdwg.mxu0
    %v238 = vmax.f32 %v160, 0.0
    %v239 = vmax.f32 %v165, 0.0
    %v240 = vmax.f32 %v170, 0.0
    %v241 = vmax.f32 %v175, 0.0
    %v242 = vmax.f32 %v180, 0.0
    %v243 = vmax.f32 %v185, 0.0
    %v244 = vmax.f32 %v190, 0.0
    %v245 = vmax.f32 %v195, 0.0
    %v246 = vmax.f32 %v200, 0.0
    %v247 = vmax.f32 %v205, 0.0
    %v248 = vmax.f32 %v210, 0.0
    %v249 = vmax.f32 %v215, 0.0
    %v250 = vmax.f32 %v220, 0.0
    %v251 = vmax.f32 %v225, 0.0
    %v252 = vmax.f32 %v230, 0.0
    %v253 = vmax.f32 %v235, 0.0
    %254 = vst [vmem:[#allocation8] sm:$0xff] %v238
    %255 = vst [vmem:[#allocation8 + $0x8] sm:$0xff] %v239
    %256 = vst [vmem:[#allocation8 + $0x10] sm:$0xff] %v240
    %257 = vst [vmem:[#allocation8 + $0x18] sm:$0xff] %v241
    %258 = vst [vmem:[#allocation8 + $0x20] sm:$0xff] %v242
    %259 = vst [vmem:[#allocation8 + $0x28] sm:$0xff] %v243
    %260 = vst [vmem:[#allocation8 + $0x30] sm:$0xff] %v244
    %261 = vst [vmem:[#allocation8 + $0x38] sm:$0xff] %v245
    %262 = vst [vmem:[#allocation8 + $0x40] sm:$0xff] %v246
    %263 = vst [vmem:[#allocation8 + $0x48] sm:$0xff] %v247
    %264 = vst [vmem:[#allocation8 + $0x50] sm:$0xff] %v248
    %265 = vst [vmem:[#allocation8 + $0x58] sm:$0xff] %v249
    %266 = vst [vmem:[#allocation8 + $0x60] sm:$0xff] %v250
    %267 = vst [vmem:[#allocation8 + $0x68] sm:$0xff] %v251
    %268 = vst [vmem:[#allocation8 + $0x70] sm:$0xff] %v252
    %269 = vst [vmem:[#allocation8 + $0x78] sm:$0xff] %v253
    // Predicated region
    $region26: #{tpu_custom_call.1} parent=1 // pred_check
      _
    $region27: #{tpu_custom_call.1} parent=1 // pred_check_branch
      %271 = sbr.rel (0) target = $region29
    $region28: #{tpu_custom_call.1} parent=1 // pred_region
      %s273 = ssub.s32 2048, 2048
      %274 = vsyncadd [#allocation4], %s273
      %s275 = sshll.u32 [#allocation8], 4
      %s276 = int_to_ptr.vmem [resolvable:$true] %s275
      %281 = dma.vmem_to_hbm [thread:$0]  %s276, 2048, %s3, [#allocation4], 128, 128, 8
    $region29: #{tpu_custom_call.1} parent=1 // pred_fallthru
      _
    // Predicated region
    $region30: #{tpu_custom_call.1} parent=1 // pred_check
      _
    $region31: #{tpu_custom_call.1} parent=1 // pred_check_branch
      %283 = sbr.rel (0) target = $region33
    $region32: #{tpu_custom_call.1} parent=1 // pred_region
      %284 = dma.done [#allocation4], 2048
    $region33: #{tpu_custom_call.1} parent=1 // pred_fallthru
      _
    %285 = vsyncpa [#allocation3], 1
    %286 = vsyncpa [#allocation6], 1
    %287 = vsyncpa [#allocation4], 1

</llo_original>
